<compile_context>
chip_gen: v6e
topology: v6e:2x2x1
jax: 0.10.0
libtpu: 0.0.40
codegen_flags: <defaults>
</compile_context>

<pallas_src>
import math
from functools import partial

import jax
import jax.numpy as jnp
from jax import lax
from jax.experimental import pallas as pl
from jax.experimental.pallas import tpu as pltpu


# --------------------------------------------------------------------------
# Projection kernel: x -> (Q*scale, K, V), padded head dim, bf16 outputs.
# --------------------------------------------------------------------------
def _proj_kernel(x_ref, wq_ref, wk_ref, wv_ref, q_ref, k_ref, v_ref, *, scale):
    x = x_ref[0]                                            # (tp, C) bf16
    q = jnp.dot(x, wq_ref[...], preferred_element_type=jnp.float32)
    q_ref[0] = (q * scale).astype(q_ref.dtype)              # fold 1/sqrt(C) here
    k_ref[0] = jnp.dot(x, wk_ref[...],
                       preferred_element_type=jnp.float32).astype(k_ref.dtype)
    v_ref[0] = jnp.dot(x, wv_ref[...],
                       preferred_element_type=jnp.float32).astype(v_ref.dtype)


# --------------------------------------------------------------------------
# Flash-attention kernel: online softmax over key blocks (trailing grid axis).
# --------------------------------------------------------------------------
def _flash_head_kernel(q_ref, k_ref, v_ref, o_ref, m_sc, l_sc, acc_sc, *, tq, tk):
    qi = pl.program_id(1)   # query block index
    kj = pl.program_id(2)   # key block index (reduction axis)

    # ---- init (once per (b, qi)): zero online-softmax statistics -----------
    @pl.when(kj == 0)
    def _init():
        m_sc[...] = jnp.full_like(m_sc, -jnp.inf)
        l_sc[...] = jnp.zeros_like(l_sc)
        acc_sc[...] = jnp.zeros_like(acc_sc)

    # ---- causal block skipping: key blocks fully above the diagonal --------
    @pl.when(kj * tk < (qi + 1) * tq)
    def _compute():
        q = q_ref[0]                                        # (tq, Hp) bf16 (pre-scaled)
        k = k_ref[0]                                        # (tk, Hp) bf16
        v = v_ref[0]                                        # (tk, Hp) bf16

        # scores: contract last dims (no k transpose on the MXU path)
        s = lax.dot_general(q, k, (((1,), (1,)), ((), ())),
                            preferred_element_type=jnp.float32)   # (tq, tk)

        def update(s_blk):
            m_prev = m_sc[...]
            m_new = jnp.maximum(m_prev, jnp.max(s_blk, axis=-1, keepdims=True))
            alpha = jnp.exp(m_prev - m_new)
            p = jnp.exp(s_blk - m_new)
            l_sc[...] = alpha * l_sc[...] + jnp.sum(p, axis=-1, keepdims=True)
            acc_sc[...] = alpha * acc_sc[...] + jnp.dot(
                p.astype(jnp.bfloat16), v, preferred_element_type=jnp.float32)
            m_sc[...] = m_new

        # Only diagonal-straddling blocks need the mask; interior blocks take
        # the unmasked fast path (saves iota/compare/select VPU work).
        on_diag = (kj + 1) * tk - 1 > qi * tq

        @pl.when(on_diag)
        def _masked():
            row = qi * tq + lax.broadcasted_iota(jnp.int32, (tq, tk), 0)
            col = kj * tk + lax.broadcasted_iota(jnp.int32, (tq, tk), 1)
            # kj == 0 is always computed first and always leaves every row with
            # at least one finite score, so -inf never propagates to NaN.
            update(jnp.where(col <= row, s, -jnp.inf))

        @pl.when(jnp.logical_not(on_diag))
        def _unmasked():
            update(s)

    # ---- finalize: normalize with approx reciprocal, lane-dense bf16 store --
    @pl.when(kj == pl.num_programs(2) - 1)
    def _final():
        inv_l = pl.reciprocal(l_sc[...], approx=True)
        o_ref[0] = (acc_sc[...] * inv_l).astype(o_ref.dtype)


def _pick_tile(T, preferred):
    """Largest tile <= preferred dividing T; prefer multiples of 128, then 16, 8."""
    if T <= preferred:
        return T
    for mult in (128, 16, 8):
        t = (preferred // mult) * mult
        while t >= mult:
            if T % t == 0:
                return t
            t -= mult
    # TODO(synk): pad T instead of falling back to a full-extent tile for
    # awkward sequence lengths (can exceed VMEM on v7x for very large T).
    return T


def head_forward(x, w_key, w_query, w_value, *, tq=512, tk=512, tp=512):
    """One causal self-attention head.

    Args:
      x:        (B, T, C) float32
      w_key:    (H, C) float32 (PyTorch nn.Linear weight layout, bias=False)
      w_query:  (H, C) float32
      w_value:  (H, C) float32
    Returns:
      (B, T, H) float32
    """
    B, T, C = x.shape
    H = w_key.shape[0]
    Hp = ((H + 127) // 128) * 128        # pad head dim to full 128-lane vregs

    tq = _pick_tile(T, tq)
    tk = _pick_tile(T, tk)
    tp = _pick_tile(T, tp)
    nq, nk, npj = T // tq, T // tk, T // tp
    scale = C ** (-0.5)                  # matches the PyTorch module (n_embd)

    x_bf = x.astype(jnp.bfloat16)

    def prep(w):                         # (H, C) -> (C, Hp) bf16, zero-padded
        return jnp.pad(w.T, ((0, 0), (0, Hp - H))).astype(jnp.bfloat16)

    wq_t, wk_t, wv_t = prep(w_query), prep(w_key), prep(w_value)

    # ---- pass 1: project Q (pre-scaled), K, V once -------------------------
    q, k, v = pl.pallas_call(
        partial(_proj_kernel, scale=scale),
        out_shape=(
            jax.ShapeDtypeStruct((B, T, Hp), jnp.bfloat16),
            jax.ShapeDtypeStruct((B, T, Hp), jnp.bfloat16),
            jax.ShapeDtypeStruct((B, T, Hp), jnp.bfloat16),
        ),
        grid_spec=pltpu.PrefetchScalarGridSpec(
            num_scalar_prefetch=0,
            grid=(B, npj),
            in_specs=[
                pl.BlockSpec((1, tp, C), lambda b, i: (b, i, 0)),   # x rows
                pl.BlockSpec((C, Hp), lambda b, i: (0, 0)),          # Wq^T
                pl.BlockSpec((C, Hp), lambda b, i: (0, 0)),          # Wk^T
                pl.BlockSpec((C, Hp), lambda b, i: (0, 0)),          # Wv^T
            ],
            out_specs=[
                pl.BlockSpec((1, tp, Hp), lambda b, i: (b, i, 0)),
                pl.BlockSpec((1, tp, Hp), lambda b, i: (b, i, 0)),
                pl.BlockSpec((1, tp, Hp), lambda b, i: (b, i, 0)),
            ],
        ),
        compiler_params=pltpu.CompilerParams(
            dimension_semantics=("parallel", "parallel")),
        cost_estimate=pl.CostEstimate(
            flops=int(2 * 3 * B * T * C * Hp),
            transcendentals=0,
            bytes_accessed=int(2 * (B * T * C + 3 * C * Hp + 3 * B * T * Hp)),
        ),
    )(x_bf, wq_t, wk_t, wv_t)

    # ---- pass 2: flash attention -------------------------------------------
    def kv_map(b, qi, kj):
        # Clamp kj so key blocks fully above the diagonal are never DMA'd
        # (they revisit the resident block; pl.when skips the compute).
        last = ((qi + 1) * tq - 1) // tk
        return (b, jnp.minimum(kj, last), 0)

    kernel = partial(_flash_head_kernel, tq=tq, tk=tk)

    out = pl.pallas_call(
        kernel,
        out_shape=jax.ShapeDtypeStruct((B, T, Hp), jnp.bfloat16),
        grid_spec=pltpu.PrefetchScalarGridSpec(
            num_scalar_prefetch=0,
            grid=(B, nq, nk),
            in_specs=[
                pl.BlockSpec((1, tq, Hp), lambda b, qi, kj: (b, qi, 0)),  # Q
                pl.BlockSpec((1, tk, Hp), kv_map),                         # K
                pl.BlockSpec((1, tk, Hp), kv_map),                         # V
            ],
            out_specs=pl.BlockSpec((1, tq, Hp), lambda b, qi, kj: (b, qi, 0)),
            scratch_shapes=[
                pltpu.VMEM((tq, 1), jnp.float32),     # running max m
                pltpu.VMEM((tq, 1), jnp.float32),     # running sum l
                pltpu.VMEM((tq, Hp), jnp.float32),    # output accumulator
            ],
        ),
        compiler_params=pltpu.CompilerParams(
            dimension_semantics=("parallel", "parallel", "arbitrary")),
        cost_estimate=pl.CostEstimate(
            flops=int(2 * 2 * B * T * T * Hp * 0.5),          # QK^T + PV, causal
            transcendentals=int(B * T * T * 0.5 + B * T),      # exp
            bytes_accessed=int(2 * (3 * B * T * Hp + B * T * Hp)),
        ),
    )(q, k, v)

    return out[..., :H].astype(x.dtype)


def head_reference(x, w_key, w_query, w_value):
    """Pure-JAX f32 reference for correctness checking."""
    B, T, C = x.shape
    k = x @ w_key.T
    q = x @ w_query.T
    v = x @ w_value.T
    wei = (q @ jnp.swapaxes(k, -2, -1)) * (C ** -0.5)
    row = jnp.arange(T)[:, None]
    col = jnp.arange(T)[None, :]
    wei = jnp.where(col <= row, wei, -jnp.inf)
    wei = jax.nn.softmax(wei, axis=-1)
    return wei @ v


if __name__ == "__main__":
    # Small shapes consistent with the module: B=2, T=8 (block_size >= 8),
    # C=n_embd=32, head_size=16.
    B, T, C, H = 2, 8, 32, 16

    key = jax.random.PRNGKey(0)
    kx, kk, kq, kv = jax.random.split(key, 4)

    x = jax.random.normal(kx, (B, T, C), dtype=jnp.float32)
    bound = 1.0 / math.sqrt(C)
    w_key = jax.random.uniform(kk, (H, C), jnp.float32, -bound, bound)
    w_query = jax.random.uniform(kq, (H, C), jnp.float32, -bound, bound)
    w_value = jax.random.uniform(kv, (H, C), jnp.float32, -bound, bound)

    out = head_forward(x, w_key, w_query, w_value)
    out = jax.block_until_ready(out)

    ref = head_reference(x, w_key, w_query, w_value)
    assert out.shape == (B, T, H)
    # bf16 MXU inputs + bf16 output + approx reciprocal -> loosened tolerance
    assert jnp.allclose(out, ref, atol=2e-2, rtol=2e-2), "mismatch vs reference"

    print("KERNEL_OK")
</pallas_src>

<mosaic_0001>
module attributes {stable_mosaic.version = 11 : i64} {
  func.func @_proj_kernel(%arg0: i32, %arg1: i32, %arg2: memref<1x8x32xbf16, #tpu.memory_space<vmem>>, %arg3: memref<32x128xbf16, #tpu.memory_space<vmem>>, %arg4: memref<32x128xbf16, #tpu.memory_space<vmem>>, %arg5: memref<32x128xbf16, #tpu.memory_space<vmem>>, %arg6: memref<1x8x128xbf16, #tpu.memory_space<vmem>>, %arg7: memref<1x8x128xbf16, #tpu.memory_space<vmem>>, %arg8: memref<1x8x128xbf16, #tpu.memory_space<vmem>>) attributes {dimension_semantics = [#tpu.dimension_semantics<parallel>, #tpu.dimension_semantics<parallel>], iteration_bounds = array<i64: 2, 1>, scalar_prefetch = 0 : i64, scratch_operands = 0 : i64, tpu.core_type = #tpu.core_type<tc>, window_params = [{transform_indices = @transform_0, window_bounds = array<i64: 1, 8, 32>}, {pipeline_mode = #tpu.pipeline_mode<synchronous>, transform_indices = @transform_1, window_bounds = array<i64: 32, 128>}, {pipeline_mode = #tpu.pipeline_mode<synchronous>, transform_indices = @transform_2, window_bounds = array<i64: 32, 128>}, {pipeline_mode = #tpu.pipeline_mode<synchronous>, transform_indices = @transform_3, window_bounds = array<i64: 32, 128>}, {transform_indices = @transform_4, window_bounds = array<i64: 1, 8, 128>}, {transform_indices = @transform_5, window_bounds = array<i64: 1, 8, 128>}, {transform_indices = @transform_6, window_bounds = array<i64: 1, 8, 128>}]} {
    %c0 = arith.constant 0 : index
    %c0_0 = arith.constant 0 : index
    %c0_1 = arith.constant 0 : index
    %0 = vector.load %arg2[%c0, %c0_0, %c0_1] : memref<1x8x32xbf16, #tpu.memory_space<vmem>>, vector<1x8x32xbf16>
    %1 = vector.shape_cast %0 : vector<1x8x32xbf16> to vector<8x32xbf16>
    %c0_2 = arith.constant 0 : index
    %c0_3 = arith.constant 0 : index
    %2 = vector.load %arg3[%c0_2, %c0_3] : memref<32x128xbf16, #tpu.memory_space<vmem>>, vector<32x128xbf16>
    %cst = arith.constant dense<0.000000e+00> : vector<8x128xf32>
    %3 = tpu.matmul %1, %2, %cst {dimension_numbers = #tpu.dot_dimension_numbers<[1], [0], [0], [1], [0, 0, 1, 1], [], []>} : vector<8x32xbf16>, vector<32x128xbf16>, vector<8x128xf32> -> vector<8x128xf32>
    %cst_4 = arith.constant 0.176776692 : f32
    %4 = vector.broadcast %cst_4 : f32 to vector<8x128xf32>
    %5 = arith.mulf %3, %4 : vector<8x128xf32>
    %6 = arith.truncf %5 : vector<8x128xf32> to vector<8x128xbf16>
    %c0_5 = arith.constant 0 : index
    %c0_6 = arith.constant 0 : index
    %c0_7 = arith.constant 0 : index
    %7 = vector.load %arg6[%c0_5, %c0_6, %c0_7] : memref<1x8x128xbf16, #tpu.memory_space<vmem>>, vector<1x8x128xbf16>
    %8 = vector.shape_cast %7 : vector<1x8x128xbf16> to vector<8x128xbf16>
    %9 = vector.shape_cast %6 : vector<8x128xbf16> to vector<1x8x128xbf16>
    tpu.vector_store %arg6[%c0_5, %c0_6, %c0_7], %9 {strides = array<i32>} : memref<1x8x128xbf16, #tpu.memory_space<vmem>>, vector<1x8x128xbf16>,
    %c0_8 = arith.constant 0 : index
    %c0_9 = arith.constant 0 : index
    %10 = vector.load %arg4[%c0_8, %c0_9] : memref<32x128xbf16, #tpu.memory_space<vmem>>, vector<32x128xbf16>
    %cst_10 = arith.constant dense<0.000000e+00> : vector<8x128xf32>
    %11 = tpu.matmul %1, %10, %cst_10 {dimension_numbers = #tpu.dot_dimension_numbers<[1], [0], [0], [1], [0, 0, 1, 1], [], []>} : vector<8x32xbf16>, vector<32x128xbf16>, vector<8x128xf32> -> vector<8x128xf32>
    %12 = arith.truncf %11 : vector<8x128xf32> to vector<8x128xbf16>
    %c0_11 = arith.constant 0 : index
    %c0_12 = arith.constant 0 : index
    %c0_13 = arith.constant 0 : index
    %13 = vector.load %arg7[%c0_11, %c0_12, %c0_13] : memref<1x8x128xbf16, #tpu.memory_space<vmem>>, vector<1x8x128xbf16>
    %14 = vector.shape_cast %13 : vector<1x8x128xbf16> to vector<8x128xbf16>
    %15 = vector.shape_cast %12 : vector<8x128xbf16> to vector<1x8x128xbf16>
    tpu.vector_store %arg7[%c0_11, %c0_12, %c0_13], %15 {strides = array<i32>} : memref<1x8x128xbf16, #tpu.memory_space<vmem>>, vector<1x8x128xbf16>,
    %c0_14 = arith.constant 0 : index
    %c0_15 = arith.constant 0 : index
    %16 = vector.load %arg5[%c0_14, %c0_15] : memref<32x128xbf16, #tpu.memory_space<vmem>>, vector<32x128xbf16>
    %cst_16 = arith.constant dense<0.000000e+00> : vector<8x128xf32>
    %17 = tpu.matmul %1, %16, %cst_16 {dimension_numbers = #tpu.dot_dimension_numbers<[1], [0], [0], [1], [0, 0, 1, 1], [], []>} : vector<8x32xbf16>, vector<32x128xbf16>, vector<8x128xf32> -> vector<8x128xf32>
    %18 = arith.truncf %17 : vector<8x128xf32> to vector<8x128xbf16>
    %c0_17 = arith.constant 0 : index
    %c0_18 = arith.constant 0 : index
    %c0_19 = arith.constant 0 : index
    %19 = vector.load %arg8[%c0_17, %c0_18, %c0_19] : memref<1x8x128xbf16, #tpu.memory_space<vmem>>, vector<1x8x128xbf16>
    %20 = vector.shape_cast %19 : vector<1x8x128xbf16> to vector<8x128xbf16>
    %21 = vector.shape_cast %18 : vector<8x128xbf16> to vector<1x8x128xbf16>
    tpu.vector_store %arg8[%c0_17, %c0_18, %c0_19], %21 {strides = array<i32>} : memref<1x8x128xbf16, #tpu.memory_space<vmem>>, vector<1x8x128xbf16>,
    return
  }
  func.func @transform_0(%arg0: i32, %arg1: i32) -> (i32, i32, i32) {
    %c0_i32 = arith.constant 0 : i32
    %c0_i32_0 = arith.constant 0 : i32
    return %arg0, %arg1, %c0_i32 : i32, i32, i32
  }
  func.func @transform_1(%arg0: i32, %arg1: i32) -> (i32, i32) {
    %c0_i32 = arith.constant 0 : i32
    %c0_i32_0 = arith.constant 0 : i32
    %c0_i32_1 = arith.constant 0 : i32
    return %c0_i32, %c0_i32_0 : i32, i32
  }
  func.func @transform_2(%arg0: i32, %arg1: i32) -> (i32, i32) {
    %c0_i32 = arith.constant 0 : i32
    %c0_i32_0 = arith.constant 0 : i32
    %c0_i32_1 = arith.constant 0 : i32
    return %c0_i32, %c0_i32_0 : i32, i32
  }
  func.func @transform_3(%arg0: i32, %arg1: i32) -> (i32, i32) {
    %c0_i32 = arith.constant 0 : i32
    %c0_i32_0 = arith.constant 0 : i32
    %c0_i32_1 = arith.constant 0 : i32
    return %c0_i32, %c0_i32_0 : i32, i32
  }
  func.func @transform_4(%arg0: i32, %arg1: i32) -> (i32, i32, i32) {
    %c0_i32 = arith.constant 0 : i32
    %c0_i32_0 = arith.constant 0 : i32
    return %arg0, %arg1, %c0_i32 : i32, i32, i32
  }
  func.func @transform_5(%arg0: i32, %arg1: i32) -> (i32, i32, i32) {
    %c0_i32 = arith.constant 0 : i32
    %c0_i32_0 = arith.constant 0 : i32
    return %arg0, %arg1, %c0_i32 : i32, i32, i32
  }
  func.func @transform_6(%arg0: i32, %arg1: i32) -> (i32, i32, i32) {
    %c0_i32 = arith.constant 0 : i32
    %c0_i32_0 = arith.constant 0 : i32
    return %arg0, %arg1, %c0_i32 : i32, i32, i32
  }
}

</mosaic_0001>

<llo_original>
// kernel: tpu_custom_call.1
$region0: #{tpu_custom_call.1}
  #allocation0 [shape = 'u32[]', space=smem, size = 0x4, offset = 0x4, fixed_abs, tag = 'smem constant byte address 0x4 - core index']
  #allocation1 [shape = 'u32[144,128]{1,0:T(1,128)}', space=vmem, size = 0x12000, scoped, tag = 'internal scratch']
  %s0 = inlined_call_operand.hbm [shape: bf16[2,8,32], index: 0, kind: input, shape index: {}]
  %s1 = inlined_call_operand.hbm [shape: bf16[32,128], index: 1, kind: input, shape index: {}]
  %s2 = inlined_call_operand.hbm [shape: bf16[32,128], index: 2, kind: input, shape index: {}]
  %s3 = inlined_call_operand.hbm [shape: bf16[32,128], index: 3, kind: input, shape index: {}]
  %s4 = inlined_call_operand.hbm [shape: bf16[2,8,128], index: 4, kind: output, shape index: {0}]
  %s5 = inlined_call_operand.hbm [shape: bf16[2,8,128], index: 5, kind: output, shape index: {1}]
  %s6 = inlined_call_operand.hbm [shape: bf16[2,8,128], index: 6, kind: output, shape index: {2}]
  %7 = xla_tuple %s4, %s5, %s6
  %s8 = sld [smem:[#allocation0]]
  $region81: #{tpu_custom_call.1} parent=0
    _
  %s10 = ssub.s32 1, %s8
  %s11 = scalar_select 0, %s10, %s8
  $region1: #{tpu_custom_call.1} parent=0
    #allocation2 [shape = 'u8[4096]{0}', space=vmem, size = 0x1000, scoped, tag = 'input window, operand 0']
    #allocation3 [shape = 's32[2]{0}', space=sflag, size = 0x8, scoped, tag = 'scoped memory for tpu_custom_call.1']
    #allocation4 [shape = 's32[2]{0}', space=sflag, size = 0x8, scoped, tag = 'scoped memory for tpu_custom_call.1']
    #allocation5 [shape = 'u8[8192]{0}', space=vmem, size = 0x2000, scoped, tag = 'input window, operand 1, single buffered']
    #allocation6 [shape = 's32[1]{0}', space=sflag, size = 0x4, scoped, tag = 'scoped memory for tpu_custom_call.1']
    #allocation7 [shape = 'u8[8192]{0}', space=vmem, size = 0x2000, scoped, tag = 'input window, operand 2, single buffered']
    #allocation8 [shape = 'u8[8192]{0}', space=vmem, size = 0x2000, scoped, tag = 'input window, operand 3, single buffered']
    #allocation9 [shape = 's32[1]{0}', space=sflag, size = 0x4, scoped, tag = 'scoped memory for tpu_custom_call.1']
    #allocation10 [shape = 'u8[4096]{0}', space=vmem, size = 0x1000, scoped, tag = 'output window, operand 0']
    #allocation11 [shape = 'u8[4096]{0}', space=vmem, size = 0x1000, scoped, tag = 'output window, operand 1']
    #allocation12 [shape = 's32[2]{0}', space=sflag, size = 0x8, scoped, tag = 'scoped memory for tpu_custom_call.1']
    #allocation13 [shape = 'u8[4096]{0}', space=vmem, size = 0x1000, scoped, tag = 'output window, operand 2']
    %12 = vsyncpa [#allocation3], 0
    %s13 = scalar_lea.sflag [#allocation3], 1
    %14 = vsyncpa %s13, 0
    %15 = vsyncpa [#allocation6], 0
    %16 = vsyncpa [#allocation9], 0
    %17 = vsyncpa [#allocation4], 0
    %s18 = scalar_lea.sflag [#allocation4], 1
    %19 = vsyncpa %s18, 0
    %20 = vsyncpa [#allocation12], 0
    %s21 = scalar_lea.sflag [#allocation12], 1
    %22 = vsyncpa %s21, 0
    loop: start=0, step=1, limit=4
    $region2: #{tpu_custom_call.1} parent=1 // loop_pre_header
      _
    $region3: #{tpu_custom_call.1} parent=1 // loop_header
      %s24 = sphi 0, %s28
      %p25 = scmp.ge.s32.totalorder %s24, 4
      %s31 = sphi 0, %s43
      %s32 = sphi 0, %s39
      %s33 = sphi 0, %s31
      %s34 = sphi 0, %s32
      %s35 = sphi 0, %s33
      %s36 = sphi 0, %s34
      %s48 = sphi 0, %s50
      %s51 = sphi 0, %s48
      %s52 = sphi 0, %s51
      %s68 = sphi 0, %s52
      %s72 = sphi 0, %s72
      %s74 = sphi 0, %s72
      %s75 = sphi 0, %s74
      %s89 = sphi 0, %s75
      %s93 = sphi 0, %s93
      %s95 = sphi 0, %s93
      %s96 = sphi 0, %s95
      %s110 = sphi 0, %s96
      %s114 = sphi 0, %s114
      %s116 = sphi 0, %s114
      %s117 = sphi 0, %s116
      %s131 = sphi 0, %s117
      %s139 = sphi 0, %s141
      %s142 = sphi 0, %s139
      %s143 = sphi 0, %s142
      %s159 = sphi 0, %s143
      %s167 = sphi 0, %s169
      %s170 = sphi 0, %s167
      %s171 = sphi 0, %s170
      %s187 = sphi 0, %s171
      %s195 = sphi 0, %s197
      %s198 = sphi 0, %s195
      %s199 = sphi 0, %s198
      %s215 = sphi 0, %s199
    $region4: #{tpu_custom_call.1} parent=1 // loop_header_branch
      %27 = sbr.rel (%p25) target = $region8
    $region5: #{tpu_custom_call.1} parent=1 // loop_body
      %s29 = ssub.s32 %s24, 1
      %s30 = ssub.s32 %s24, 2
      %s37 = sadd.s32 1, %s32
      %p38 = scmp.ge.s32.totalorder %s37, 1
      %s39 = scalar_select %p38, 0, %s37
      %s40 = sadd.s32 1, %s31
      %s41 = scalar_select %p38, %s40, %s31
      %p42 = scmp.ge.s32.totalorder %s41, 2
      %s43 = scalar_select %p42, 0, %s41
      %s44 = ssub.s32 %s31, %s43
      %s45 = ssub.s32 %s32, %s39
      %s46 = sor.u32 %s44, %s45
      %p47 = scmp.eq.s32.totalorder %s46, 0
      %s49 = sadd.s32 %s48, 1
      %s50 = scalar_select %p47, %s48, %s49
      %p53 = pneg %p47
      %p54 = scmp.eq.s32.totalorder %s24, 1
      %p55 = por %p53, %p54
      %p56 = scmp.ne.s32.totalorder %s48, %s51
      %p57 = scmp.eq.s32.totalorder %s24, 0
      %p58 = por %p56, %p57
      %p59 = scmp.ne.s32.totalorder %s48, %s51
      %p60 = scmp.eq.s32.totalorder %s29, 1
      %p61 = por %p59, %p60
      %p62 = scmp.ne.s32.totalorder %s51, %s52
      %p63 = scmp.eq.s32.totalorder %s29, 0
      %p64 = por %p62, %p63
      %p65 = scmp.ne.s32.totalorder %s51, %s52
      %p66 = scmp.eq.s32.totalorder %s30, 1
      %p67 = por %p65, %p66
      %p69 = scmp.ne.s32.totalorder %s52, %s68
      %p70 = scmp.eq.s32.totalorder %s30, 0
      %p71 = por %p69, %p70
      %s73 = sadd.s32 %s72, 1
      %p76 = scmp.eq.s32.totalorder %s24, 1
      %p77 = scmp.ne.s32.totalorder %s72, %s74
      %p78 = scmp.eq.s32.totalorder %s24, 0
      %p79 = por %p77, %p78
      %p80 = scmp.ne.s32.totalorder %s72, %s74
      %p81 = scmp.eq.s32.totalorder %s29, 1
      %p82 = por %p80, %p81
      %p83 = scmp.ne.s32.totalorder %s74, %s75
      %p84 = scmp.eq.s32.totalorder %s29, 0
      %p85 = por %p83, %p84
      %p86 = scmp.ne.s32.totalorder %s74, %s75
      %p87 = scmp.eq.s32.totalorder %s30, 1
      %p88 = por %p86, %p87
      %p90 = scmp.ne.s32.totalorder %s75, %s89
      %p91 = scmp.eq.s32.totalorder %s30, 0
      %p92 = por %p90, %p91
      %s94 = sadd.s32 %s93, 1
      %p97 = scmp.eq.s32.totalorder %s24, 1
      %p98 = scmp.ne.s32.totalorder %s93, %s95
      %p99 = scmp.eq.s32.totalorder %s24, 0
      %p100 = por %p98, %p99
      %p101 = scmp.ne.s32.totalorder %s93, %s95
      %p102 = scmp.eq.s32.totalorder %s29, 1
      %p103 = por %p101, %p102
      %p104 = scmp.ne.s32.totalorder %s95, %s96
      %p105 = scmp.eq.s32.totalorder %s29, 0
      %p106 = por %p104, %p105
      %p107 = scmp.ne.s32.totalorder %s95, %s96
      %p108 = scmp.eq.s32.totalorder %s30, 1
      %p109 = por %p107, %p108
      %p111 = scmp.ne.s32.totalorder %s96, %s110
      %p112 = scmp.eq.s32.totalorder %s30, 0
      %p113 = por %p111, %p112
      %s115 = sadd.s32 %s114, 1
      %p118 = scmp.eq.s32.totalorder %s24, 1
      %p119 = scmp.ne.s32.totalorder %s114, %s116
      %p120 = scmp.eq.s32.totalorder %s24, 0
      %p121 = por %p119, %p120
      %p122 = scmp.ne.s32.totalorder %s114, %s116
      %p123 = scmp.eq.s32.totalorder %s29, 1
      %p124 = por %p122, %p123
      %p125 = scmp.ne.s32.totalorder %s116, %s117
      %p126 = scmp.eq.s32.totalorder %s29, 0
      %p127 = por %p125, %p126
      %p128 = scmp.ne.s32.totalorder %s116, %s117
      %p129 = scmp.eq.s32.totalorder %s30, 1
      %p130 = por %p128, %p129
      %p132 = scmp.ne.s32.totalorder %s117, %s131
      %p133 = scmp.eq.s32.totalorder %s30, 0
      %p134 = por %p132, %p133
      %s135 = ssub.s32 %s31, %s43
      %s136 = ssub.s32 %s32, %s39
      %s137 = sor.u32 %s135, %s136
      %p138 = scmp.eq.s32.totalorder %s137, 0
      %s140 = sadd.s32 %s139, 1
      %s141 = scalar_select %p138, %s139, %s140
      %p144 = pneg %p138
      %p145 = scmp.eq.s32.totalorder %s24, 1
      %p146 = por %p144, %p145
      %p147 = scmp.ne.s32.totalorder %s139, %s142
      %p148 = scmp.eq.s32.totalorder %s24, 0
      %p149 = por %p147, %p148
      %p150 = scmp.ne.s32.totalorder %s139, %s142
      %p151 = scmp.eq.s32.totalorder %s29, 1
      %p152 = por %p150, %p151
      %p153 = scmp.ne.s32.totalorder %s142, %s143
      %p154 = scmp.eq.s32.totalorder %s29, 0
      %p155 = por %p153, %p154
      %p156 = scmp.ne.s32.totalorder %s142, %s143
      %p157 = scmp.eq.s32.totalorder %s30, 1
      %p158 = por %p156, %p157
      %p160 = scmp.ne.s32.totalorder %s143, %s159
      %p161 = scmp.eq.s32.totalorder %s30, 0
      %p162 = por %p160, %p161
      %s163 = ssub.s32 %s31, %s43
      %s164 = ssub.s32 %s32, %s39
      %s165 = sor.u32 %s163, %s164
      %p166 = scmp.eq.s32.totalorder %s165, 0
      %s168 = sadd.s32 %s167, 1
      %s169 = scalar_select %p166, %s167, %s168
      %p172 = pneg %p166
      %p173 = scmp.eq.s32.totalorder %s24, 1
      %p174 = por %p172, %p173
      %p175 = scmp.ne.s32.totalorder %s167, %s170
      %p176 = scmp.eq.s32.totalorder %s24, 0
      %p177 = por %p175, %p176
      %p178 = scmp.ne.s32.totalorder %s167, %s170
      %p179 = scmp.eq.s32.totalorder %s29, 1
      %p180 = por %p178, %p179
      %p181 = scmp.ne.s32.totalorder %s170, %s171
      %p182 = scmp.eq.s32.totalorder %s29, 0
      %p183 = por %p181, %p182
      %p184 = scmp.ne.s32.totalorder %s170, %s171
      %p185 = scmp.eq.s32.totalorder %s30, 1
      %p186 = por %p184, %p185
      %p188 = scmp.ne.s32.totalorder %s171, %s187
      %p189 = scmp.eq.s32.totalorder %s30, 0
      %p190 = por %p188, %p189
      %s191 = ssub.s32 %s31, %s43
      %s192 = ssub.s32 %s32, %s39
      %s193 = sor.u32 %s191, %s192
      %p194 = scmp.eq.s32.totalorder %s193, 0
      %s196 = sadd.s32 %s195, 1
      %s197 = scalar_select %p194, %s195, %s196
      %p200 = pneg %p194
      %p201 = scmp.eq.s32.totalorder %s24, 1
      %p202 = por %p200, %p201
      %p203 = scmp.ne.s32.totalorder %s195, %s198
      %p204 = scmp.eq.s32.totalorder %s24, 0
      %p205 = por %p203, %p204
      %p206 = scmp.ne.s32.totalorder %s195, %s198
      %p207 = scmp.eq.s32.totalorder %s29, 1
      %p208 = por %p206, %p207
      %p209 = scmp.ne.s32.totalorder %s198, %s199
      %p210 = scmp.eq.s32.totalorder %s29, 0
      %p211 = por %p209, %p210
      %p212 = scmp.ne.s32.totalorder %s198, %s199
      %p213 = scmp.eq.s32.totalorder %s30, 1
      %p214 = por %p212, %p213
      %p216 = scmp.ne.s32.totalorder %s199, %s215
      %p217 = scmp.eq.s32.totalorder %s30, 0
      %p218 = por %p216, %p217
      %p219 = scmp.le.s32.totalorder 1, %s24
      %p220 = scmp.lt.s32.totalorder %s24, 3
      %p221 = pnand %p219, %p220
      %p222 = pneg %p221
      // Predicated region
      $region9: #{tpu_custom_call.1} parent=5 // pred_check
        _
      $region10: #{tpu_custom_call.1} parent=5 // pred_check_branch
        %224 = sbr.rel (%p221) target = $region12
      $region11: #{tpu_custom_call.1} parent=5 // pred_region
        %s225 = ssub.s32 %s24, 1
        // Predicated region
        $region13: #{tpu_custom_call.1} parent=11 // pred_check
          %p226 = pneg %p85
        $region14: #{tpu_custom_call.1} parent=11 // pred_check_branch
          %228 = sbr.rel (%p226) target = $region16
        $region15: #{tpu_custom_call.1} parent=11 // pred_region
          %s230 = ssub.s32 256, 256
          %231 = vsyncadd [#allocation6], %s230
          %s232 = sshll.u32 [#allocation5], 4
          %s233 = int_to_ptr.vmem [resolvable:$true] %s232
          %238 = dma.hbm_to_vmem [thread:$0]  %s1, 256, %s233, [#allocation6], 64, 64, 4
        $region16: #{tpu_custom_call.1} parent=11 // pred_fallthru
          _
        // Predicated region
        $region17: #{tpu_custom_call.1} parent=11 // pred_check
          %p239 = pneg %p106
        $region18: #{tpu_custom_call.1} parent=11 // pred_check_branch
          %241 = sbr.rel (%p239) target = $region20
        $region19: #{tpu_custom_call.1} parent=11 // pred_region
          %s243 = ssub.s32 256, 256
          %244 = vsyncadd [#allocation6], %s243
          %s245 = sshll.u32 [#allocation7], 4
          %s246 = int_to_ptr.vmem [resolvable:$true] %s245
          %251 = dma.hbm_to_vmem [thread:$0]  %s2, 256, %s246, [#allocation6], 64, 64, 4
        $region20: #{tpu_custom_call.1} parent=11 // pred_fallthru
          _
        // Predicated region
        $region21: #{tpu_custom_call.1} parent=11 // pred_check
          %p252 = pneg %p127
        $region22: #{tpu_custom_call.1} parent=11 // pred_check_branch
          %254 = sbr.rel (%p252) target = $region24
        $region23: #{tpu_custom_call.1} parent=11 // pred_region
          %s256 = ssub.s32 256, 256
          %257 = vsyncadd [#allocation9], %s256
          %s258 = sshll.u32 [#allocation8], 4
          %s259 = int_to_ptr.vmem [resolvable:$true] %s258
          %264 = dma.hbm_to_vmem [thread:$0]  %s3, 256, %s259, [#allocation9], 64, 64, 4
        $region24: #{tpu_custom_call.1} parent=11 // pred_fallthru
          _
      $region12: #{tpu_custom_call.1} parent=5 // pred_fallthru
        _
      %p265 = scmp.lt.s32.totalorder %s24, 2
      // Predicated region
      $region25: #{tpu_custom_call.1} parent=5 // pred_check
        %p266 = pneg %p265
      $region26: #{tpu_custom_call.1} parent=5 // pred_check_branch
        %268 = sbr.rel (%p266) target = $region28
      $region27: #{tpu_custom_call.1} parent=5 // pred_region
        // Predicated region
        $region29: #{tpu_custom_call.1} parent=27 // pred_check
          %p269 = pneg %p58
        $region30: #{tpu_custom_call.1} parent=27 // pred_check_branch
          %271 = sbr.rel (%p269) target = $region32
        $region31: #{tpu_custom_call.1} parent=27 // pred_region
          %s272 = sand.u32 %s48, 1
          %s273 = scalar_lea.sflag [#allocation3], %s272
          %s274 = sand.u32 %s48, 1
          %s275 = smul.addr %s274, 4
          %s276 = scalar_lea.vmem [#allocation2], %s275
          %s278 = ssub.s32 64, 64
          %279 = vsyncadd %s273, %s278
          %s280 = sadd.s32 %s32, %s31
          %s281 = smul.addr %s280, 64
          %s282 = scalar_lea.hbm %s0, %s281
          %s284 = sshll.u32 %s276, 4
          %s285 = int_to_ptr.vmem [resolvable:$true] %s284
          %287 = dma.hbm_to_vmem [thread:$0]  %s282, 64, %s285, %s273
        $region32: #{tpu_custom_call.1} parent=27 // pred_fallthru
          _
      $region28: #{tpu_custom_call.1} parent=5 // pred_fallthru
        _
      %p288 = scmp.le.s32.totalorder 1, %s24
      %p289 = scmp.lt.s32.totalorder %s24, 3
      %p290 = pnand %p288, %p289
      %p291 = pneg %p290
      // Predicated region
      $region33: #{tpu_custom_call.1} parent=5 // pred_check
        _
      $region34: #{tpu_custom_call.1} parent=5 // pred_check_branch
        %293 = sbr.rel (%p290) target = $region36
      $region35: #{tpu_custom_call.1} parent=5 // pred_region
        %s294 = ssub.s32 %s24, 1
        %s295 = sand.u32 %s51, 1
        %s296 = scalar_lea.sflag [#allocation3], %s295
        %s297 = sand.u32 %s51, 1
        %s298 = smul.addr %s297, 4
        %s299 = scalar_lea.vmem [#allocation2], %s298
        // Predicated region
        $region37: #{tpu_custom_call.1} parent=35 // pred_check
          %p300 = pneg %p64
        $region38: #{tpu_custom_call.1} parent=35 // pred_check_branch
          %302 = sbr.rel (%p300) target = $region40
        $region39: #{tpu_custom_call.1} parent=35 // pred_region
          %303 = dma.done %s296, 64
        $region40: #{tpu_custom_call.1} parent=35 // pred_fallthru
          _
        // Predicated region
        $region41: #{tpu_custom_call.1} parent=35 // pred_check
          %p304 = pneg %p85
        $region42: #{tpu_custom_call.1} parent=35 // pred_check_branch
          %306 = sbr.rel (%p304) target = $region44
        $region43: #{tpu_custom_call.1} parent=35 // pred_region
          %307 = dma.done [#allocation6], 256
        $region44: #{tpu_custom_call.1} parent=35 // pred_fallthru
          _
        // Predicated region
        $region45: #{tpu_custom_call.1} parent=35 // pred_check
          %p308 = pneg %p106
        $region46: #{tpu_custom_call.1} parent=35 // pred_check_branch
          %310 = sbr.rel (%p308) target = $region48
        $region47: #{tpu_custom_call.1} parent=35 // pred_region
          %311 = dma.done [#allocation6], 256
        $region48: #{tpu_custom_call.1} parent=35 // pred_fallthru
          _
        // Predicated region
        $region49: #{tpu_custom_call.1} parent=35 // pred_check
          %p312 = pneg %p127
        $region50: #{tpu_custom_call.1} parent=35 // pred_check_branch
          %314 = sbr.rel (%p312) target = $region52
        $region51: #{tpu_custom_call.1} parent=35 // pred_region
          %315 = dma.done [#allocation9], 256
        $region52: #{tpu_custom_call.1} parent=35 // pred_fallthru
          _
        %s316 = sand.u32 %s51, 1
        %s317 = scalar_lea.sflag [#allocation3], %s316
        %s318 = sand.u32 %s51, 1
        %s319 = smul.addr %s318, 4
        %s320 = scalar_lea.vmem [#allocation2], %s319
        %p321 = pneg %p64
        %p322 = pneg %p61
        %p323 = pneg %p85
        %p324 = pneg %p82
        %p325 = pneg %p106
        %p326 = pneg %p103
        %p327 = pneg %p127
        %p328 = pneg %p124
        %p329 = pneg %p155
        %p330 = pneg %p152
        %s331 = sand.u32 %s142, 1
        %s332 = scalar_lea.sflag [#allocation4], %s331
        %s333 = sand.u32 %s142, 1
        %s334 = smul.addr %s333, 4
        %s335 = scalar_lea.vmem [#allocation10], %s334
        %p336 = pneg %p183
        %p337 = pneg %p180
        %s338 = sand.u32 %s29, 1
        %s339 = scalar_lea.sflag [#allocation12], %s338
        %s340 = sand.u32 %s170, 1
        %s341 = smul.addr %s340, 4
        %s342 = scalar_lea.vmem [#allocation11], %s341
        %p343 = pneg %p211
        %p344 = pneg %p208
        %s345 = sand.u32 %s29, 1
        %s346 = scalar_lea.sflag [#allocation12], %s345
        %s347 = sand.u32 %s198, 1
        %s348 = smul.addr %s347, 4
        %s349 = scalar_lea.vmem [#allocation13], %s348
        %v351 = vld [vmem:[%s299] sm:$0xf]
        %v352 = vld [vmem:[#allocation5] sm:$0xf]
        %v353 = vld [vmem:[#allocation5 + $0x4] sm:$0xf]
        %v354 = vld [vmem:[#allocation5 + $0x8] sm:$0xf]
        %v355 = vld [vmem:[#allocation5 + $0xc] sm:$0xf]
        %v360 = vunpack.c.l.b16 %v352
        %v361 = vunpack.c.l.b16 %v353
        %v362 = vunpack.c.l.b16 %v354
        %v363 = vunpack.c.l.b16 %v355
        %v364 = vpack.c.b16 %v361, %v360
        %v365 = vpack.c.b16 %v363, %v362
        %vm368 = vcmask 261120
        %v370 = vsel %vm368, %v351, 0
        %372 = vmatprep.subr.bf16.mxu0 0
        %373 = vmatpush1.bf16.msra.mxu0 0
        %374 = vmatprep.subr.bf16.mxu0 0
        %375 = vmatpush1.bf16.msra.mxu0 0
        %376 = vmatprep.subr.bf16.mxu0 0
        %377 = vmatpush1.bf16.msra.mxu0 0
        %378 = vmatprep.subr.bf16.mxu0 0
        %379 = vmatpush1.bf16.msra.mxu0 0
        %380 = vmatprep.subr.bf16.mxu0 0
        %381 = vmatpush1.bf16.msra.mxu0 0
        %382 = vmatprep.subr.bf16.mxu0 0
        %383 = vmatpush1.bf16.msra.mxu0 0
        %384 = vmatprep.subr.bf16.mxu0 0
        %385 = vmatpush1.bf16.msra.mxu0 %v365
        %386 = vmatprep.subr.bf16.mxu0 0
        %387 = vmatpush1.bf16.msra.mxu0 %v364
        %388 = vmatprep.subr.bf16.mxu0 0
        %389 = vmatpush2.bf16.msra.mxu0 0
        %390 = vmatprep.subr.bf16.mxu0 0
        %391 = vmatpush2.bf16.msra.mxu0 0
        %392 = vmatprep.subr.bf16.mxu0 0
        %393 = vmatpush2.bf16.msra.mxu0 0
        %394 = vmatprep.subr.bf16.mxu0 0
        %395 = vmatpush2.bf16.msra.mxu0 0
        %396 = vmatprep.subr.bf16.mxu0 0
        %397 = vmatpush2.bf16.msra.mxu0 0
        %398 = vmatprep.subr.bf16.mxu0 0
        %399 = vmatpush2.bf16.msra.mxu0 0
        %400 = vmatprep.subr.bf16.mxu0 0
        %401 = vmatpush2.bf16.msra.mxu0 0
        %402 = vmatprep.subr.bf16.mxu0 0
        %403 = vmatpush2.bf16.msra.mxu0 0
        %404 = vmatprep.mubr.bf16.mxu0 0
        %405 = vmatmul.mubr.bf16.gmra.mxu0 %v370
        %v406 = vpop.f32.mrf.mxu0
        %v407 = vadd.f32 0.0, %v406
        %v408 = vpop.f32.mrf.mxu0
        %v409 = vpop.f32.mrf.mxu0
        %v410 = vpop.f32.mrf.mxu0
        %411 = vdwg.mxu0
        %v412 = vmul.f32 %v407, 0.17677669
        %v413 = vpack.c.bf16 %v412, %v412
        %414 = vst [vmem:[%s335] sm:$0xf] %v413
        %v415 = vld [vmem:[#allocation7] sm:$0xf]
        %v416 = vld [vmem:[#allocation7 + $0x4] sm:$0xf]
        %v417 = vld [vmem:[#allocation7 + $0x8] sm:$0xf]
        %v418 = vld [vmem:[#allocation7 + $0xc] sm:$0xf]
        %v423 = vunpack.c.l.b16 %v415
        %v424 = vunpack.c.l.b16 %v416
        %v425 = vunpack.c.l.b16 %v417
        %v426 = vunpack.c.l.b16 %v418
        %v427 = vpack.c.b16 %v424, %v423
        %v428 = vpack.c.b16 %v426, %v425
        %431 = vmatprep.subr.bf16.mxu0 0
        %432 = vmatpush1.bf16.msra.mxu0 0
        %433 = vmatprep.subr.bf16.mxu0 0
        %434 = vmatpush1.bf16.msra.mxu0 0
        %435 = vmatprep.subr.bf16.mxu0 0
        %436 = vmatpush1.bf16.msra.mxu0 0
        %437 = vmatprep.subr.bf16.mxu0 0
        %438 = vmatpush1.bf16.msra.mxu0 0
        %439 = vmatprep.subr.bf16.mxu0 0
        %440 = vmatpush1.bf16.msra.mxu0 0
        %441 = vmatprep.subr.bf16.mxu0 0
        %442 = vmatpush1.bf16.msra.mxu0 0
        %443 = vmatprep.subr.bf16.mxu0 0
        %444 = vmatpush1.bf16.msra.mxu0 %v428
        %445 = vmatprep.subr.bf16.mxu0 0
        %446 = vmatpush1.bf16.msra.mxu0 %v427
        %447 = vmatprep.subr.bf16.mxu0 0
        %448 = vmatpush2.bf16.msra.mxu0 0
        %449 = vmatprep.subr.bf16.mxu0 0
        %450 = vmatpush2.bf16.msra.mxu0 0
        %451 = vmatprep.subr.bf16.mxu0 0
        %452 = vmatpush2.bf16.msra.mxu0 0
        %453 = vmatprep.subr.bf16.mxu0 0
        %454 = vmatpush2.bf16.msra.mxu0 0
        %455 = vmatprep.subr.bf16.mxu0 0
        %456 = vmatpush2.bf16.msra.mxu0 0
        %457 = vmatprep.subr.bf16.mxu0 0
        %458 = vmatpush2.bf16.msra.mxu0 0
        %459 = vmatprep.subr.bf16.mxu0 0
        %460 = vmatpush2.bf16.msra.mxu0 0
        %461 = vmatprep.subr.bf16.mxu0 0
        %462 = vmatpush2.bf16.msra.mxu0 0
        %463 = vmatprep.mubr.bf16.mxu0 0
        %464 = vmatmul.mubr.bf16.gmra.mxu0 %v370
        %v465 = vpop.f32.mrf.mxu0
        %v466 = vadd.f32 0.0, %v465
        %v467 = vpop.f32.mrf.mxu0
        %v468 = vpop.f32.mrf.mxu0
        %v469 = vpop.f32.mrf.mxu0
        %470 = vdwg.mxu0
        %v471 = vpack.c.bf16 %v466, %v466
        %472 = vst [vmem:[%s342] sm:$0xf] %v471
        %v473 = vld [vmem:[#allocation8] sm:$0xf]
        %v474 = vld [vmem:[#allocation8 + $0x4] sm:$0xf]
        %v475 = vld [vmem:[#allocation8 + $0x8] sm:$0xf]
        %v476 = vld [vmem:[#allocation8 + $0xc] sm:$0xf]
        %v481 = vunpack.c.l.b16 %v473
        %v482 = vunpack.c.l.b16 %v474
        %v483 = vunpack.c.l.b16 %v475
        %v484 = vunpack.c.l.b16 %v476
        %v485 = vpack.c.b16 %v482, %v481
        %v486 = vpack.c.b16 %v484, %v483
        %489 = vmatprep.subr.bf16.mxu0 0
        %490 = vmatpush1.bf16.msra.mxu0 0
        %491 = vmatprep.subr.bf16.mxu0 0
        %492 = vmatpush1.bf16.msra.mxu0 0
        %493 = vmatprep.subr.bf16.mxu0 0
        %494 = vmatpush1.bf16.msra.mxu0 0
        %495 = vmatprep.subr.bf16.mxu0 0
        %496 = vmatpush1.bf16.msra.mxu0 0
        %497 = vmatprep.subr.bf16.mxu0 0
        %498 = vmatpush1.bf16.msra.mxu0 0
        %499 = vmatprep.subr.bf16.mxu0 0
        %500 = vmatpush1.bf16.msra.mxu0 0
        %501 = vmatprep.subr.bf16.mxu0 0
        %502 = vmatpush1.bf16.msra.mxu0 %v486
        %503 = vmatprep.subr.bf16.mxu0 0
        %504 = vmatpush1.bf16.msra.mxu0 %v485
        %505 = vmatprep.subr.bf16.mxu0 0
        %506 = vmatpush2.bf16.msra.mxu0 0
        %507 = vmatprep.subr.bf16.mxu0 0
        %508 = vmatpush2.bf16.msra.mxu0 0
        %509 = vmatprep.subr.bf16.mxu0 0
        %510 = vmatpush2.bf16.msra.mxu0 0
        %511 = vmatprep.subr.bf16.mxu0 0
        %512 = vmatpush2.bf16.msra.mxu0 0
        %513 = vmatprep.subr.bf16.mxu0 0
        %514 = vmatpush2.bf16.msra.mxu0 0
        %515 = vmatprep.subr.bf16.mxu0 0
        %516 = vmatpush2.bf16.msra.mxu0 0
        %517 = vmatprep.subr.bf16.mxu0 0
        %518 = vmatpush2.bf16.msra.mxu0 0
        %519 = vmatprep.subr.bf16.mxu0 0
        %520 = vmatpush2.bf16.msra.mxu0 0
        %521 = vmatprep.mubr.bf16.mxu0 0
        %522 = vmatmul.mubr.bf16.gmra.mxu0 %v370
        %v523 = vpop.f32.mrf.mxu0
        %v524 = vadd.f32 0.0, %v523
        %v525 = vpop.f32.mrf.mxu0
        %v526 = vpop.f32.mrf.mxu0
        %v527 = vpop.f32.mrf.mxu0
        %528 = vdwg.mxu0
        %v529 = vpack.c.bf16 %v524, %v524
        %530 = vst [vmem:[%s349] sm:$0xf] %v529
        %s531 = sand.u32 %s142, 1
        %s532 = scalar_lea.sflag [#allocation4], %s531
        %s533 = sand.u32 %s142, 1
        %s534 = smul.addr %s533, 4
        %s535 = scalar_lea.vmem [#allocation10], %s534
        %s536 = sand.u32 %s29, 1
        %s537 = scalar_lea.sflag [#allocation12], %s536
        %s538 = sand.u32 %s170, 1
        %s539 = smul.addr %s538, 4
        %s540 = scalar_lea.vmem [#allocation11], %s539
        %s541 = sand.u32 %s29, 1
        %s542 = scalar_lea.sflag [#allocation12], %s541
        %s543 = sand.u32 %s198, 1
        %s544 = smul.addr %s543, 4
        %s545 = scalar_lea.vmem [#allocation13], %s544
        // Predicated region
        $region53: #{tpu_custom_call.1} parent=35 // pred_check
          %p546 = pneg %p152
        $region54: #{tpu_custom_call.1} parent=35 // pred_check_branch
          %548 = sbr.rel (%p546) target = $region56
        $region55: #{tpu_custom_call.1} parent=35 // pred_region
          %s550 = ssub.s32 64, 64
          %551 = vsyncadd %s532, %s550
          %s552 = sadd.s32 %s34, %s33
          %s553 = smul.addr %s552, 64
          %s554 = scalar_lea.hbm %s4, %s553
          %s556 = sshll.u32 %s535, 4
          %s557 = int_to_ptr.vmem [resolvable:$true] %s556
          %559 = dma.vmem_to_hbm [thread:$0]  %s557, 64, %s554, %s532
        $region56: #{tpu_custom_call.1} parent=35 // pred_fallthru
          _
        // Predicated region
        $region57: #{tpu_custom_call.1} parent=35 // pred_check
          %p560 = pneg %p180
        $region58: #{tpu_custom_call.1} parent=35 // pred_check_branch
          %562 = sbr.rel (%p560) target = $region60
        $region59: #{tpu_custom_call.1} parent=35 // pred_region
          %s564 = ssub.s32 64, 64
          %565 = vsyncadd %s537, %s564
          %s566 = sadd.s32 %s34, %s33
          %s567 = smul.addr %s566, 64
          %s568 = scalar_lea.hbm %s5, %s567
          %s570 = sshll.u32 %s540, 4
          %s571 = int_to_ptr.vmem [resolvable:$true] %s570
          %573 = dma.vmem_to_hbm [thread:$0]  %s571, 64, %s568, %s537
        $region60: #{tpu_custom_call.1} parent=35 // pred_fallthru
          _
        // Predicated region
        $region61: #{tpu_custom_call.1} parent=35 // pred_check
          %p574 = pneg %p208
        $region62: #{tpu_custom_call.1} parent=35 // pred_check_branch
          %576 = sbr.rel (%p574) target = $region64
        $region63: #{tpu_custom_call.1} parent=35 // pred_region
          %s578 = ssub.s32 64, 64
          %579 = vsyncadd %s542, %s578
          %s580 = sadd.s32 %s34, %s33
          %s581 = smul.addr %s580, 64
          %s582 = scalar_lea.hbm %s6, %s581
          %s584 = sshll.u32 %s545, 4
          %s585 = int_to_ptr.vmem [resolvable:$true] %s584
          %587 = dma.vmem_to_hbm [thread:$0]  %s585, 64, %s582, %s542
        $region64: #{tpu_custom_call.1} parent=35 // pred_fallthru
          _
      $region36: #{tpu_custom_call.1} parent=5 // pred_fallthru
        _
      %p588 = scmp.le.s32.totalorder 2, %s24
      // Predicated region
      $region65: #{tpu_custom_call.1} parent=5 // pred_check
        %p589 = pneg %p588
      $region66: #{tpu_custom_call.1} parent=5 // pred_check_branch
        %591 = sbr.rel (%p589) target = $region68
      $region67: #{tpu_custom_call.1} parent=5 // pred_region
        %s592 = ssub.s32 %s24, 2
        // Predicated region
        $region69: #{tpu_custom_call.1} parent=67 // pred_check
          %p593 = pneg %p158
        $region70: #{tpu_custom_call.1} parent=67 // pred_check_branch
          %595 = sbr.rel (%p593) target = $region72
        $region71: #{tpu_custom_call.1} parent=67 // pred_region
          %s596 = sand.u32 %s143, 1
          %s597 = scalar_lea.sflag [#allocation4], %s596
          %s598 = sand.u32 %s143, 1
          %s599 = smul.addr %s598, 4
          %s600 = scalar_lea.vmem [#allocation10], %s599
          %601 = dma.done %s597, 64
        $region72: #{tpu_custom_call.1} parent=67 // pred_fallthru
          _
        // Predicated region
        $region73: #{tpu_custom_call.1} parent=67 // pred_check
          %p602 = pneg %p186
        $region74: #{tpu_custom_call.1} parent=67 // pred_check_branch
          %604 = sbr.rel (%p602) target = $region76
        $region75: #{tpu_custom_call.1} parent=67 // pred_region
          %s605 = sand.u32 %s30, 1
          %s606 = scalar_lea.sflag [#allocation12], %s605
          %s607 = sand.u32 %s171, 1
          %s608 = smul.addr %s607, 4
          %s609 = scalar_lea.vmem [#allocation11], %s608
          %610 = dma.done %s606, 64
        $region76: #{tpu_custom_call.1} parent=67 // pred_fallthru
          _
        // Predicated region
        $region77: #{tpu_custom_call.1} parent=67 // pred_check
          %p611 = pneg %p214
        $region78: #{tpu_custom_call.1} parent=67 // pred_check_branch
          %613 = sbr.rel (%p611) target = $region80
        $region79: #{tpu_custom_call.1} parent=67 // pred_region
          %s614 = sand.u32 %s30, 1
          %s615 = scalar_lea.sflag [#allocation12], %s614
          %s616 = sand.u32 %s199, 1
          %s617 = smul.addr %s616, 4
          %s618 = scalar_lea.vmem [#allocation13], %s617
          %619 = dma.done %s615, 64
        $region80: #{tpu_custom_call.1} parent=67 // pred_fallthru
          _
      $region68: #{tpu_custom_call.1} parent=5 // pred_fallthru
        _
    $region6: #{tpu_custom_call.1} parent=1 // loop_footer
      %s28 = sadd.s32 1, %s24
    $region7: #{tpu_custom_call.1} parent=1 // loop_footer_branch
      %23 = sbr.rel target = $region3
    $region8: #{tpu_custom_call.1} parent=1 // loop_exit
      _
    %620 = vsyncpa [#allocation3], 1
    %s621 = scalar_lea.sflag [#allocation3], 1
    %622 = vsyncpa %s621, 1
    %623 = vsyncpa [#allocation6], 1
    %624 = vsyncpa [#allocation9], 1
    %625 = vsyncpa [#allocation4], 1
    %s626 = scalar_lea.sflag [#allocation4], 1
    %627 = vsyncpa %s626, 1
    %628 = vsyncpa [#allocation12], 1
    %s629 = scalar_lea.sflag [#allocation12], 1
    %630 = vsyncpa %s629, 1

</llo_original>
